<compile_context>
chip_gen: v6e
topology: v6e:2x2x1
jax: 0.10.0
libtpu: 0.0.40
codegen_flags: <defaults>
</compile_context>

<pallas_src>
import jax
import jax.numpy as jnp
from jax.experimental import pallas as pl
from jax.experimental.pallas import tpu as pltpu

IN_F = 18
HID_F = 40
OUT_F = 10
OUT_PAD = 128        # lane-dense padded output width
MAX_TILE_B = 256     # keep h=(TILE_B, 40->128 padded) f32 at ~32 vregs, no spills
ALIGN_B = 16         # bf16 sublane packing alignment for batch tiles


def _mlp_kernel(x_ref, w1_ref, b1_ref, w2_ref, b2_ref, o_ref):
    # fc1: bf16 MXU matmul, f32 accumulation; bias + ReLU in f32 on the VPU.
    h = jnp.dot(x_ref[...], w1_ref[...], preferred_element_type=jnp.float32)
    h = jnp.maximum(h + b1_ref[...], 0.0)               # (TILE_B, 40) + (1, 40)
    # fc2: bf16 MXU matmul into the lane-dense (128-wide) padded output.
    y = jnp.dot(h.astype(jnp.bfloat16), w2_ref[...],
                preferred_element_type=jnp.float32)
    y = y + b2_ref[...]                                  # (TILE_B, 128) + (1, 128)
    o_ref[...] = y.astype(o_ref.dtype)


def net_forward(x, w1, b1, w2, b2):
    """x: (B, 18) f32, w1: (18, 40), b1: (1, 40), w2: (40, 10), b2: (1, 10)."""
    B = x.shape[0]

    # --- batch tiling (pad B so every grid step sees a full tile) ----------
    b_aligned = ((B + ALIGN_B - 1) // ALIGN_B) * ALIGN_B
    tile_b = min(MAX_TILE_B, b_aligned)
    b_pad = ((b_aligned + tile_b - 1) // tile_b) * tile_b
    if b_pad != B:
        x = jnp.pad(x, ((0, b_pad - B), (0, 0)))
    grid = (b_pad // tile_b,)

    # --- lane-dense fc2 params (pad 10 -> 128 output columns with zeros) ---
    w2p = jnp.pad(w2, ((0, 0), (0, OUT_PAD - OUT_F)))
    b2p = jnp.pad(b2, ((0, 0), (0, OUT_PAD - OUT_F)))

    # --- bf16 MXU inputs (accumulation stays f32 inside the kernel) --------
    xb = x.astype(jnp.bfloat16)
    w1b = w1.astype(jnp.bfloat16)
    w2b = w2p.astype(jnp.bfloat16)

    cost = pl.CostEstimate(
        flops=2 * b_pad * (IN_F * HID_F + HID_F * OUT_PAD),
        transcendentals=0,
        bytes_accessed=(xb.size * 2 + w1b.size * 2 + b1.size * 4
                        + w2b.size * 2 + b2p.size * 4
                        + b_pad * OUT_PAD * 4),
    )

    out = pl.pallas_call(
        _mlp_kernel,
        out_shape=jax.ShapeDtypeStruct((b_pad, OUT_PAD), jnp.float32),
        grid=grid,
        in_specs=[
            pl.BlockSpec((tile_b, IN_F), lambda i: (i, 0)),   # streamed x tile
            pl.BlockSpec(w1b.shape, lambda i: (0, 0)),        # resident weights
            pl.BlockSpec(b1.shape, lambda i: (0, 0)),
            pl.BlockSpec(w2b.shape, lambda i: (0, 0)),
            pl.BlockSpec(b2p.shape, lambda i: (0, 0)),
        ],
        out_specs=pl.BlockSpec((tile_b, OUT_PAD), lambda i: (i, 0)),
        compiler_params=pltpu.CompilerParams(
            dimension_semantics=("parallel",)),
        cost_estimate=cost,
    )(xb, w1b, b1, w2b, b2p)

    return out[:B, :OUT_F]


def init_params(key):
    """Deterministic init matching nn.Linear's default U(-1/sqrt(fan_in), ...)."""
    k1, k2, k3, k4 = jax.random.split(key, 4)
    bound1 = 1.0 / jnp.sqrt(float(IN_F))
    bound2 = 1.0 / jnp.sqrt(float(HID_F))
    # stored as (in, out), i.e. transpose of PyTorch's (out, in) weight layout
    w1 = jax.random.uniform(k1, (IN_F, HID_F), jnp.float32, -bound1, bound1)
    b1 = jax.random.uniform(k2, (1, HID_F), jnp.float32, -bound1, bound1)
    w2 = jax.random.uniform(k3, (HID_F, OUT_F), jnp.float32, -bound2, bound2)
    b2 = jax.random.uniform(k4, (1, OUT_F), jnp.float32, -bound2, bound2)
    return w1, b1, w2, b2


if __name__ == "__main__":
    key = jax.random.PRNGKey(0)
    pkey, xkey = jax.random.split(key)
    w1, b1, w2, b2 = init_params(pkey)

    batch = 8
    x = jax.random.normal(xkey, (batch, IN_F), jnp.float32)

    out = net_forward(x, w1, b1, w2, b2)
    jax.block_until_ready(out)
    assert out.shape == (batch, OUT_F)

    # Reference matching the kernel's precision choices (bf16 MXU inputs,
    # f32 accumulation), plus a looser check vs. the pure-f32 reference.
    xf = x.astype(jnp.bfloat16).astype(jnp.float32)
    w1f = w1.astype(jnp.bfloat16).astype(jnp.float32)
    w2p = jnp.pad(w2, ((0, 0), (0, OUT_PAD - OUT_F)))
    w2f = w2p.astype(jnp.bfloat16).astype(jnp.float32)[:, :OUT_F]
    h_ref = jnp.maximum(xf @ w1f + b1, 0.0)
    ref_bf16 = h_ref.astype(jnp.bfloat16).astype(jnp.float32) @ w2f + b2
    ref_f32 = jnp.maximum(x @ w1 + b1, 0.0) @ w2 + b2

    assert jnp.allclose(out, ref_bf16, atol=1e-3, rtol=1e-3)
    assert jnp.allclose(out, ref_f32, atol=3e-2, rtol=3e-2)

    print("KERNEL_OK")
</pallas_src>

<mosaic_0001>
module attributes {stable_mosaic.version = 11 : i64} {
  func.func @_mlp_kernel(%arg0: i32, %arg1: memref<16x18xbf16, #tpu.memory_space<vmem>>, %arg2: memref<18x40xbf16, #tpu.memory_space<vmem>>, %arg3: memref<1x40xf32, #tpu.memory_space<vmem>>, %arg4: memref<40x128xbf16, #tpu.memory_space<vmem>>, %arg5: memref<1x128xf32, #tpu.memory_space<vmem>>, %arg6: memref<16x128xf32, #tpu.memory_space<vmem>>) attributes {dimension_semantics = [#tpu.dimension_semantics<parallel>], iteration_bounds = array<i64: 1>, scalar_prefetch = 0 : i64, scratch_operands = 0 : i64, tpu.core_type = #tpu.core_type<tc>, window_params = [{transform_indices = @transform_0, window_bounds = array<i64: 16, 18>}, {pipeline_mode = #tpu.pipeline_mode<synchronous>, transform_indices = @transform_1, window_bounds = array<i64: 18, 40>}, {pipeline_mode = #tpu.pipeline_mode<synchronous>, transform_indices = @transform_2, window_bounds = array<i64: 1, 40>}, {pipeline_mode = #tpu.pipeline_mode<synchronous>, transform_indices = @transform_3, window_bounds = array<i64: 40, 128>}, {pipeline_mode = #tpu.pipeline_mode<synchronous>, transform_indices = @transform_4, window_bounds = array<i64: 1, 128>}, {transform_indices = @transform_5, window_bounds = array<i64: 16, 128>}]} {
    %c0 = arith.constant 0 : index
    %c0_0 = arith.constant 0 : index
    %0 = vector.load %arg1[%c0, %c0_0] : memref<16x18xbf16, #tpu.memory_space<vmem>>, vector<16x18xbf16>
    %c0_1 = arith.constant 0 : index
    %c0_2 = arith.constant 0 : index
    %1 = vector.load %arg2[%c0_1, %c0_2] : memref<18x40xbf16, #tpu.memory_space<vmem>>, vector<18x40xbf16>
    %cst = arith.constant dense<0.000000e+00> : vector<16x40xf32>
    %2 = tpu.matmul %0, %1, %cst {dimension_numbers = #tpu.dot_dimension_numbers<[1], [0], [0], [1], [0, 0, 1, 1], [], []>} : vector<16x18xbf16>, vector<18x40xbf16>, vector<16x40xf32> -> vector<16x40xf32>
    %c0_3 = arith.constant 0 : index
    %c0_4 = arith.constant 0 : index
    %3 = vector.load %arg3[%c0_3, %c0_4] : memref<1x40xf32, #tpu.memory_space<vmem>>, vector<1x40xf32>
    %4 = vector.broadcast %3 : vector<1x40xf32> to vector<16x40xf32>
    %5 = arith.addf %2, %4 : vector<16x40xf32>
    %cst_5 = arith.constant 0.000000e+00 : f32
    %6 = vector.broadcast %cst_5 : f32 to vector<16x40xf32>
    %7 = arith.maximumf %5, %6 : vector<16x40xf32>
    %8 = arith.truncf %7 : vector<16x40xf32> to vector<16x40xbf16>
    %c0_6 = arith.constant 0 : index
    %c0_7 = arith.constant 0 : index
    %9 = vector.load %arg4[%c0_6, %c0_7] : memref<40x128xbf16, #tpu.memory_space<vmem>>, vector<40x128xbf16>
    %cst_8 = arith.constant dense<0.000000e+00> : vector<16x128xf32>
    %10 = tpu.matmul %8, %9, %cst_8 {dimension_numbers = #tpu.dot_dimension_numbers<[1], [0], [0], [1], [0, 0, 1, 1], [], []>} : vector<16x40xbf16>, vector<40x128xbf16>, vector<16x128xf32> -> vector<16x128xf32>
    %c0_9 = arith.constant 0 : index
    %c0_10 = arith.constant 0 : index
    %11 = vector.load %arg5[%c0_9, %c0_10] : memref<1x128xf32, #tpu.memory_space<vmem>>, vector<1x128xf32>
    %12 = vector.broadcast %11 : vector<1x128xf32> to vector<16x128xf32>
    %13 = arith.addf %10, %12 : vector<16x128xf32>
    %c0_11 = arith.constant 0 : index
    %c0_12 = arith.constant 0 : index
    %14 = vector.load %arg6[%c0_11, %c0_12] : memref<16x128xf32, #tpu.memory_space<vmem>>, vector<16x128xf32>
    tpu.vector_store %arg6[%c0_11, %c0_12], %13 {strides = array<i32>} : memref<16x128xf32, #tpu.memory_space<vmem>>, vector<16x128xf32>,
    return
  }
  func.func @transform_0(%arg0: i32) -> (i32, i32) {
    %c0_i32 = arith.constant 0 : i32
    %c0_i32_0 = arith.constant 0 : i32
    return %arg0, %c0_i32 : i32, i32
  }
  func.func @transform_1(%arg0: i32) -> (i32, i32) {
    %c0_i32 = arith.constant 0 : i32
    %c0_i32_0 = arith.constant 0 : i32
    %c0_i32_1 = arith.constant 0 : i32
    return %c0_i32, %c0_i32_0 : i32, i32
  }
  func.func @transform_2(%arg0: i32) -> (i32, i32) {
    %c0_i32 = arith.constant 0 : i32
    %c0_i32_0 = arith.constant 0 : i32
    %c0_i32_1 = arith.constant 0 : i32
    return %c0_i32, %c0_i32_0 : i32, i32
  }
  func.func @transform_3(%arg0: i32) -> (i32, i32) {
    %c0_i32 = arith.constant 0 : i32
    %c0_i32_0 = arith.constant 0 : i32
    %c0_i32_1 = arith.constant 0 : i32
    return %c0_i32, %c0_i32_0 : i32, i32
  }
  func.func @transform_4(%arg0: i32) -> (i32, i32) {
    %c0_i32 = arith.constant 0 : i32
    %c0_i32_0 = arith.constant 0 : i32
    %c0_i32_1 = arith.constant 0 : i32
    return %c0_i32, %c0_i32_0 : i32, i32
  }
  func.func @transform_5(%arg0: i32) -> (i32, i32) {
    %c0_i32 = arith.constant 0 : i32
    %c0_i32_0 = arith.constant 0 : i32
    return %arg0, %c0_i32 : i32, i32
  }
}

</mosaic_0001>

<llo_original>
// kernel: tpu_custom_call.1
$region0: #{tpu_custom_call.1}
  #allocation0 [shape = 'u32[]', space=smem, size = 0x4, offset = 0x4, fixed_abs, tag = 'smem constant byte address 0x4 - core index']
  #allocation1 [shape = 'u32[144,128]{1,0:T(1,128)}', space=vmem, size = 0x12000, scoped, tag = 'internal scratch']
  %s0 = inlined_call_operand.hbm [shape: bf16[16,18], index: 0, kind: input, shape index: {}]
  %s1 = inlined_call_operand.hbm [shape: bf16[18,40], index: 1, kind: input, shape index: {}]
  %s2 = inlined_call_operand.vmem [shape: f32[1,40], index: 2, kind: input, shape index: {}]
  %s3 = inlined_call_operand.hbm [shape: bf16[40,128], index: 3, kind: input, shape index: {}]
  %s4 = inlined_call_operand.vmem [shape: f32[1,128], index: 4, kind: input, shape index: {}]
  %s5 = inlined_call_operand.hbm [shape: f32[16,128], index: 5, kind: output, shape index: {}]
  %s6 = sld [smem:[#allocation0]]
  $region42: #{tpu_custom_call.1} parent=0
    _
  %s8 = ssub.s32 1, %s6
  %s9 = scalar_select 0, %s8, %s6
  $region1: #{tpu_custom_call.1} parent=0
    #allocation2 [shape = 'u8[4096]{0}', space=vmem, size = 0x1000, scoped, tag = 'input window, operand 0, single buffered']
    #allocation3 [shape = 's32[1]{0}', space=sflag, size = 0x4, scoped, tag = 'scoped memory for tpu_custom_call.1']
    #allocation4 [shape = 's32[1]{0}', space=sflag, size = 0x4, scoped, tag = 'scoped memory for tpu_custom_call.1']
    #allocation5 [shape = 'u8[6144]{0}', space=vmem, size = 0x1800, scoped, tag = 'input window, operand 1, single buffered']
    #allocation6 [shape = 's32[1]{0}', space=sflag, size = 0x4, scoped, tag = 'scoped memory for tpu_custom_call.1']
    #allocation7 [shape = 'u8[10240]{0}', space=vmem, size = 0x2800, scoped, tag = 'input window, operand 3, single buffered']
    #allocation8 [shape = 'u8[8192]{0}', space=vmem, size = 0x2000, scoped, tag = 'output window, operand 0, single buffered']
    %10 = vsyncpa [#allocation3], 0
    %11 = vsyncpa [#allocation6], 0
    %12 = vsyncpa [#allocation4], 0
    // Predicated region
    $region2: #{tpu_custom_call.1} parent=1 // pred_check
      _
    $region3: #{tpu_custom_call.1} parent=1 // pred_check_branch
      %14 = sbr.rel (0) target = $region5
    $region4: #{tpu_custom_call.1} parent=1 // pred_region
      %s16 = ssub.s32 128, 128
      %17 = vsyncadd [#allocation3], %s16
      %s18 = sshll.u32 [#allocation2], 4
      %s19 = int_to_ptr.vmem [resolvable:$true] %s18
      %24 = dma.hbm_to_vmem [thread:$0]  %s0, 128, %s19, [#allocation3], 64, 64, 4
    $region5: #{tpu_custom_call.1} parent=1 // pred_fallthru
      _
    // Predicated region
    $region6: #{tpu_custom_call.1} parent=1 // pred_check
      _
    $region7: #{tpu_custom_call.1} parent=1 // pred_check_branch
      %26 = sbr.rel (0) target = $region9
    $region8: #{tpu_custom_call.1} parent=1 // pred_region
      %s28 = ssub.s32 192, 192
      %29 = vsyncadd [#allocation6], %s28
      %s30 = sshll.u32 [#allocation5], 4
      %s31 = int_to_ptr.vmem [resolvable:$true] %s30
      %36 = dma.hbm_to_vmem [thread:$0]  %s1, 192, %s31, [#allocation6], 64, 64, 4
    $region9: #{tpu_custom_call.1} parent=1 // pred_fallthru
      _
    // Predicated region
    $region10: #{tpu_custom_call.1} parent=1 // pred_check
      _
    $region11: #{tpu_custom_call.1} parent=1 // pred_check_branch
      %38 = sbr.rel (0) target = $region13
    $region12: #{tpu_custom_call.1} parent=1 // pred_region
      _
    $region13: #{tpu_custom_call.1} parent=1 // pred_fallthru
      _
    // Predicated region
    $region14: #{tpu_custom_call.1} parent=1 // pred_check
      _
    $region15: #{tpu_custom_call.1} parent=1 // pred_check_branch
      %40 = sbr.rel (0) target = $region17
    $region16: #{tpu_custom_call.1} parent=1 // pred_region
      %s42 = ssub.s32 320, 320
      %43 = vsyncadd [#allocation6], %s42
      %s44 = sshll.u32 [#allocation7], 4
      %s45 = int_to_ptr.vmem [resolvable:$true] %s44
      %50 = dma.hbm_to_vmem [thread:$0]  %s3, 320, %s45, [#allocation6], 64, 64, 4
    $region17: #{tpu_custom_call.1} parent=1 // pred_fallthru
      _
    // Predicated region
    $region18: #{tpu_custom_call.1} parent=1 // pred_check
      _
    $region19: #{tpu_custom_call.1} parent=1 // pred_check_branch
      %52 = sbr.rel (0) target = $region21
    $region20: #{tpu_custom_call.1} parent=1 // pred_region
      _
    $region21: #{tpu_custom_call.1} parent=1 // pred_fallthru
      _
    // Predicated region
    $region22: #{tpu_custom_call.1} parent=1 // pred_check
      _
    $region23: #{tpu_custom_call.1} parent=1 // pred_check_branch
      %54 = sbr.rel (0) target = $region25
    $region24: #{tpu_custom_call.1} parent=1 // pred_region
      %55 = dma.done [#allocation3], 128
    $region25: #{tpu_custom_call.1} parent=1 // pred_fallthru
      _
    // Predicated region
    $region26: #{tpu_custom_call.1} parent=1 // pred_check
      _
    $region27: #{tpu_custom_call.1} parent=1 // pred_check_branch
      %57 = sbr.rel (0) target = $region29
    $region28: #{tpu_custom_call.1} parent=1 // pred_region
      %58 = dma.done [#allocation6], 192
    $region29: #{tpu_custom_call.1} parent=1 // pred_fallthru
      _
    // Predicated region
    $region30: #{tpu_custom_call.1} parent=1 // pred_check
      _
    $region31: #{tpu_custom_call.1} parent=1 // pred_check_branch
      %60 = sbr.rel (0) target = $region33
    $region32: #{tpu_custom_call.1} parent=1 // pred_region
      %61 = dma.done [#allocation6], 320
    $region33: #{tpu_custom_call.1} parent=1 // pred_fallthru
      _
    %v63 = vld [vmem:[#allocation2] sm:$0xf]
    %v64 = vld [vmem:[#allocation2 + $0x4] sm:$0xf]
    %v65 = vld [vmem:[#allocation5] sm:$0xf]
    %v66 = vld [vmem:[#allocation5 + $0x4] sm:$0xf]
    %v67 = vld [vmem:[#allocation5 + $0x8] sm:$0x1]
    %v68 = vld [vmem:[%s2] sm:$0x1]
    %v70 = vlaneseq
    %v71 = vshrl.u32 %v70, 7
    %v72 = vsub.s32 0, %v71
    %v73 = vrot.slane %v68, %v72
    %v77 = vunpack.c.l.b16 %v63
    %v78 = vunpack.c.l.b16 %v64
    %v79 = vpack.c.b16 %v78, %v77
    %v83 = vunpack.c.l.b16 %v65
    %v84 = vunpack.c.l.b16 %v66
    %v85 = vunpack.c.l.b16 %v67
    %v86 = vpack.c.b16 %v84, %v83
    %v87 = vpack.c.b16 %v85, %v85
    %vm89 = vcmask 146432
    %v91 = vsel %vm89, %v79, 0
    %vm93 = vcmask 1040384
    %v95 = vsel %vm93, %v87, 0
    %97 = vmatprep.subr.bf16.mxu0 0
    %98 = vmatpush1.bf16.msra.mxu0 0
    %99 = vmatprep.subr.bf16.mxu0 0
    %100 = vmatpush1.bf16.msra.mxu0 0
    %101 = vmatprep.subr.bf16.mxu0 0
    %102 = vmatpush1.bf16.msra.mxu0 0
    %103 = vmatprep.subr.bf16.mxu0 0
    %104 = vmatpush1.bf16.msra.mxu0 0
    %105 = vmatprep.subr.bf16.mxu0 0
    %106 = vmatpush1.bf16.msra.mxu0 0
    %107 = vmatprep.subr.bf16.mxu0 0
    %108 = vmatpush1.bf16.msra.mxu0 0
    %109 = vmatprep.subr.bf16.mxu0 0
    %110 = vmatpush1.bf16.msra.mxu0 %v95
    %111 = vmatprep.subr.bf16.mxu0 0
    %112 = vmatpush1.bf16.msra.mxu0 %v86
    %113 = vmatprep.subr.bf16.mxu0 0
    %114 = vmatpush2.bf16.msra.mxu0 0
    %115 = vmatprep.subr.bf16.mxu0 0
    %116 = vmatpush2.bf16.msra.mxu0 0
    %117 = vmatprep.subr.bf16.mxu0 0
    %118 = vmatpush2.bf16.msra.mxu0 0
    %119 = vmatprep.subr.bf16.mxu0 0
    %120 = vmatpush2.bf16.msra.mxu0 0
    %121 = vmatprep.subr.bf16.mxu0 0
    %122 = vmatpush2.bf16.msra.mxu0 0
    %123 = vmatprep.subr.bf16.mxu0 0
    %124 = vmatpush2.bf16.msra.mxu0 0
    %125 = vmatprep.subr.bf16.mxu0 0
    %126 = vmatpush2.bf16.msra.mxu0 0
    %127 = vmatprep.subr.bf16.mxu0 0
    %128 = vmatpush2.bf16.msra.mxu0 0
    %129 = vmatprep.mubr.bf16.mxu0 0
    %130 = vmatmul.mubr.bf16.gmra.mxu0 %v91
    %v131 = vpop.f32.mrf.mxu0
    %v132 = vadd.f32 %v73, %v131
    %v133 = vpop.f32.mrf.mxu0
    %v134 = vpop.f32.mrf.mxu0
    %v135 = vadd.f32 %v73, %v134
    %v136 = vpop.f32.mrf.mxu0
    %137 = vdwg.mxu0
    %v138 = vmax.f32 %v132, 0.0
    %v139 = vmax.f32 %v135, 0.0
    %v140 = vpack.c.bf16 %v139, %v138
    %v141 = vld [vmem:[#allocation7] sm:$0xf]
    %v142 = vld [vmem:[#allocation7 + $0x4] sm:$0xf]
    %v143 = vld [vmem:[#allocation7 + $0x8] sm:$0xf]
    %v144 = vld [vmem:[#allocation7 + $0xc] sm:$0xf]
    %v145 = vld [vmem:[#allocation7 + $0x10] sm:$0xf]
    %v146 = vld [vmem:[%s4] sm:$0x1]
    %v148 = vlaneseq
    %v149 = vshrl.u32 %v148, 7
    %v150 = vsub.s32 0, %v149
    %v151 = vrot.slane %v146, %v150
    %v158 = vunpack.c.l.b16 %v141
    %v159 = vunpack.c.l.b16 %v142
    %v160 = vunpack.c.l.b16 %v143
    %v161 = vunpack.c.l.b16 %v144
    %v162 = vunpack.c.l.b16 %v145
    %v163 = vpack.c.b16 %v159, %v158
    %v164 = vpack.c.b16 %v161, %v160
    %v165 = vpack.c.b16 %v162, %v162
    %vm168 = vcmask 326656
    %v170 = vsel %vm168, %v140, 0
    %vm172 = vcmask 1043456
    %v174 = vsel %vm172, %v165, 0
    %176 = vmatprep.subr.bf16.mxu0 0
    %177 = vmatpush1.bf16.msra.mxu0 0
    %178 = vmatprep.subr.bf16.mxu0 0
    %179 = vmatpush1.bf16.msra.mxu0 0
    %180 = vmatprep.subr.bf16.mxu0 0
    %181 = vmatpush1.bf16.msra.mxu0 0
    %182 = vmatprep.subr.bf16.mxu0 0
    %183 = vmatpush1.bf16.msra.mxu0 0
    %184 = vmatprep.subr.bf16.mxu0 0
    %185 = vmatpush1.bf16.msra.mxu0 0
    %186 = vmatprep.subr.bf16.mxu0 0
    %187 = vmatpush1.bf16.msra.mxu0 %v174
    %188 = vmatprep.subr.bf16.mxu0 0
    %189 = vmatpush1.bf16.msra.mxu0 %v164
    %190 = vmatprep.subr.bf16.mxu0 0
    %191 = vmatpush1.bf16.msra.mxu0 %v163
    %192 = vmatprep.subr.bf16.mxu0 0
    %193 = vmatpush2.bf16.msra.mxu0 0
    %194 = vmatprep.subr.bf16.mxu0 0
    %195 = vmatpush2.bf16.msra.mxu0 0
    %196 = vmatprep.subr.bf16.mxu0 0
    %197 = vmatpush2.bf16.msra.mxu0 0
    %198 = vmatprep.subr.bf16.mxu0 0
    %199 = vmatpush2.bf16.msra.mxu0 0
    %200 = vmatprep.subr.bf16.mxu0 0
    %201 = vmatpush2.bf16.msra.mxu0 0
    %202 = vmatprep.subr.bf16.mxu0 0
    %203 = vmatpush2.bf16.msra.mxu0 0
    %204 = vmatprep.subr.bf16.mxu0 0
    %205 = vmatpush2.bf16.msra.mxu0 0
    %206 = vmatprep.subr.bf16.mxu0 0
    %207 = vmatpush2.bf16.msra.mxu0 0
    %208 = vmatprep.mubr.bf16.mxu0 0
    %209 = vmatmul.mubr.bf16.gmra.mxu0 %v170
    %v210 = vpop.f32.mrf.mxu0
    %v211 = vadd.f32 %v151, %v210
    %v212 = vpop.f32.mrf.mxu0
    %v213 = vpop.f32.mrf.mxu0
    %v214 = vadd.f32 %v151, %v213
    %v215 = vpop.f32.mrf.mxu0
    %216 = vdwg.mxu0
    %217 = vst [vmem:[#allocation8] sm:$0xff] %v211
    %218 = vst [vmem:[#allocation8 + $0x8] sm:$0xff] %v214
    // Predicated region
    $region34: #{tpu_custom_call.1} parent=1 // pred_check
      _
    $region35: #{tpu_custom_call.1} parent=1 // pred_check_branch
      %220 = sbr.rel (0) target = $region37
    $region36: #{tpu_custom_call.1} parent=1 // pred_region
      %s222 = ssub.s32 256, 256
      %223 = vsyncadd [#allocation4], %s222
      %s224 = sshll.u32 [#allocation8], 4
      %s225 = int_to_ptr.vmem [resolvable:$true] %s224
      %230 = dma.vmem_to_hbm [thread:$0]  %s225, 256, %s5, [#allocation4], 128, 128, 8
    $region37: #{tpu_custom_call.1} parent=1 // pred_fallthru
      _
    // Predicated region
    $region38: #{tpu_custom_call.1} parent=1 // pred_check
      _
    $region39: #{tpu_custom_call.1} parent=1 // pred_check_branch
      %232 = sbr.rel (0) target = $region41
    $region40: #{tpu_custom_call.1} parent=1 // pred_region
      %233 = dma.done [#allocation4], 256
    $region41: #{tpu_custom_call.1} parent=1 // pred_fallthru
      _
    %234 = vsyncpa [#allocation3], 1
    %235 = vsyncpa [#allocation6], 1
    %236 = vsyncpa [#allocation4], 1

</llo_original>
